<compile_context>
chip_gen: v7x
topology: tpu7x:2x2x1
jax: 0.10.0
libtpu: 0.0.40
codegen_flags: <defaults>
</compile_context>

<pallas_src>
import functools

import jax
import jax.numpy as jnp
from jax.experimental import pallas as pl
from jax.experimental.pallas import tpu as pltpu


def _two_dec_kernel(x_ref, wf_ref, bf_ref, o1_ref, o2_ref, *, c_out):
    # x_ref : (1, C_in, T)  tile of one sample, pixels on lanes
    # wf_ref: (2*C_out, C_in) fused decoder weights
    # bf_ref: (2*C_out, 1)    fused decoder biases
    x = x_ref[0]                                                   # (C_in, T)
    y = jnp.dot(wf_ref[...], x, preferred_element_type=jnp.float32)
    y = y + bf_ref[...]                                            # (2*C_out, T)
    o1_ref[0] = y[:c_out].astype(o1_ref.dtype)                     # lane-dense store
    o2_ref[0] = y[c_out:].astype(o2_ref.dtype)                     # lane-dense store


def _pick_hw_tile(hw, max_tile=2048):
    """Largest multiple of 128 (<= max_tile) that evenly divides hw.

    Falls back to the full extent when hw is not a multiple of 128 (full-dim
    blocks are always legal on TPU)."""
    if hw % 128 != 0:
        return hw
    t = min(max_tile, hw)
    t -= t % 128
    while t >= 128:
        if hw % t == 0:
            return t
        t -= 128
    return hw


def ddff_two_dec(x_nchw, w1, b1, w2, b2, *, max_hw_tile=2048):
    """Run both decoder heads on x (NCHW); return (out1, out2), each NCHW.

    x_nchw: (N, C_in, H, W) float32
    w_i:    (C_in, C_out) float32  (PyTorch Conv2d weight (C_out,C_in,1,1) transposed)
    b_i:    (C_out,) float32
    """
    N, C_in, H, W = x_nchw.shape
    C_out = w1.shape[1]
    HW = H * W

    # Free row-major reshape: NCHW -> (N, C_in, H*W).  No transpose anywhere.
    x3 = x_nchw.reshape(N, C_in, HW)

    # Fuse the two heads so one MXU matmul serves both decoders.
    wf = jnp.concatenate([w1.T, w2.T], axis=0)            # (2*C_out, C_in)
    bf = jnp.concatenate([b1, b2]).reshape(2 * C_out, 1)  # (2*C_out, 1)

    t_hw = _pick_hw_tile(HW, max_hw_tile)
    grid = (N, HW // t_hw)

    kernel = functools.partial(_two_dec_kernel, c_out=C_out)
    out1_f, out2_f = pl.pallas_call(
        kernel,
        out_shape=(
            jax.ShapeDtypeStruct((N, C_out, HW), x_nchw.dtype),
            jax.ShapeDtypeStruct((N, C_out, HW), x_nchw.dtype),
        ),
        grid_spec=pltpu.PrefetchScalarGridSpec(
            num_scalar_prefetch=0,
            grid=grid,
            in_specs=[
                pl.BlockSpec((1, C_in, t_hw), lambda n, j: (n, 0, j)),   # x tile
                pl.BlockSpec((2 * C_out, C_in), lambda n, j: (0, 0)),    # fused W
                pl.BlockSpec((2 * C_out, 1), lambda n, j: (0, 0)),       # fused b
            ],
            out_specs=[
                pl.BlockSpec((1, C_out, t_hw), lambda n, j: (n, 0, j)),
                pl.BlockSpec((1, C_out, t_hw), lambda n, j: (n, 0, j)),
            ],
        ),
        compiler_params=pltpu.CompilerParams(
            dimension_semantics=("parallel", "parallel"),
        ),
    )(x3, wf, bf)

    # Free reshapes back to NCHW.
    out1 = out1_f.reshape(N, C_out, H, W)
    out2 = out2_f.reshape(N, C_out, H, W)
    return out1, out2


def _reference(x_nchw, w1, b1, w2, b2):
    # Pure-JAX reference of the same semantics (two independent 1x1-conv heads).
    N, C_in, H, W = x_nchw.shape
    C_out = w1.shape[1]
    xf = x_nchw.reshape(N, C_in, H * W)
    o1 = jnp.einsum("co,ncp->nop", w1, xf) + b1.reshape(1, C_out, 1)
    o2 = jnp.einsum("co,ncp->nop", w2, xf) + b2.reshape(1, C_out, 1)
    return o1.reshape(N, C_out, H, W), o2.reshape(N, C_out, H, W)


if __name__ == "__main__":
    key = jax.random.PRNGKey(0)
    k_x, k_w1, k_b1, k_w2, k_b2 = jax.random.split(key, 5)

    N, C_in, H, W = 2, 32, 16, 16   # small decoder-feature shapes
    C_out = 8

    x = jax.random.normal(k_x, (N, C_in, H, W), dtype=jnp.float32)
    # deterministic "Conv2d 1x1" params: PyTorch weight (C_out, C_in, 1, 1) -> (C_in, C_out)
    w1 = 0.05 * jax.random.normal(k_w1, (C_in, C_out), dtype=jnp.float32)
    b1 = 0.01 * jax.random.normal(k_b1, (C_out,), dtype=jnp.float32)
    w2 = 0.05 * jax.random.normal(k_w2, (C_in, C_out), dtype=jnp.float32)
    b2 = 0.01 * jax.random.normal(k_b2, (C_out,), dtype=jnp.float32)

    out1, out2 = ddff_two_dec(x, w1, b1, w2, b2)
    jax.block_until_ready((out1, out2))

    r1, r2 = _reference(x, w1, b1, w2, b2)
    assert out1.shape == (N, C_out, H, W) and out2.shape == (N, C_out, H, W)
    assert jnp.allclose(out1, r1, atol=1e-5, rtol=1e-5)
    assert jnp.allclose(out2, r2, atol=1e-5, rtol=1e-5)

    print("KERNEL_OK")
</pallas_src>

<mosaic_0001>
module attributes {stable_mosaic.version = 11 : i64} {
  func.func @_two_dec_kernel(%arg0: i32, %arg1: i32, %arg2: memref<1x32x256xf32, #tpu.memory_space<vmem>>, %arg3: memref<16x32xf32, #tpu.memory_space<vmem>>, %arg4: memref<16x1xf32, #tpu.memory_space<vmem>>, %arg5: memref<1x8x256xf32, #tpu.memory_space<vmem>>, %arg6: memref<1x8x256xf32, #tpu.memory_space<vmem>>) attributes {dimension_semantics = [#tpu.dimension_semantics<parallel>, #tpu.dimension_semantics<parallel>], iteration_bounds = array<i64: 2, 1>, scalar_prefetch = 0 : i64, scratch_operands = 0 : i64, tpu.core_type = #tpu.core_type<tc>, window_params = [{transform_indices = @transform_0, window_bounds = array<i64: 1, 32, 256>}, {pipeline_mode = #tpu.pipeline_mode<synchronous>, transform_indices = @transform_1, window_bounds = array<i64: 16, 32>}, {pipeline_mode = #tpu.pipeline_mode<synchronous>, transform_indices = @transform_2, window_bounds = array<i64: 16, 1>}, {transform_indices = @transform_3, window_bounds = array<i64: 1, 8, 256>}, {transform_indices = @transform_4, window_bounds = array<i64: 1, 8, 256>}]} {
    %c0 = arith.constant 0 : index
    %c0_0 = arith.constant 0 : index
    %c0_1 = arith.constant 0 : index
    %0 = vector.load %arg2[%c0, %c0_0, %c0_1] : memref<1x32x256xf32, #tpu.memory_space<vmem>>, vector<1x32x256xf32>
    %1 = vector.shape_cast %0 : vector<1x32x256xf32> to vector<32x256xf32>
    %c0_2 = arith.constant 0 : index
    %c0_3 = arith.constant 0 : index
    %2 = vector.load %arg3[%c0_2, %c0_3] : memref<16x32xf32, #tpu.memory_space<vmem>>, vector<16x32xf32>
    %cst = arith.constant dense<0.000000e+00> : vector<16x256xf32>
    %3 = tpu.matmul %2, %1, %cst {dimension_numbers = #tpu.dot_dimension_numbers<[1], [0], [0], [1], [0, 0, 1, 1], [], []>} : vector<16x32xf32>, vector<32x256xf32>, vector<16x256xf32> -> vector<16x256xf32>
    %c0_4 = arith.constant 0 : index
    %c0_5 = arith.constant 0 : index
    %4 = vector.load %arg4[%c0_4, %c0_5] : memref<16x1xf32, #tpu.memory_space<vmem>>, vector<16x1xf32>
    %5 = vector.broadcast %4 : vector<16x1xf32> to vector<16x256xf32>
    %6 = arith.addf %3, %5 : vector<16x256xf32>
    %7 = vector.extract_strided_slice %6 {offsets = [0, 0], sizes = [8, 256], strides = [1, 1]} : vector<16x256xf32> to vector<8x256xf32>
    %c0_6 = arith.constant 0 : index
    %c0_7 = arith.constant 0 : index
    %c0_8 = arith.constant 0 : index
    %8 = vector.load %arg5[%c0_6, %c0_7, %c0_8] : memref<1x8x256xf32, #tpu.memory_space<vmem>>, vector<1x8x256xf32>
    %9 = vector.shape_cast %8 : vector<1x8x256xf32> to vector<8x256xf32>
    %10 = vector.shape_cast %7 : vector<8x256xf32> to vector<1x8x256xf32>
    tpu.vector_store %arg5[%c0_6, %c0_7, %c0_8], %10 {strides = array<i32>} : memref<1x8x256xf32, #tpu.memory_space<vmem>>, vector<1x8x256xf32>,
    %11 = vector.extract_strided_slice %6 {offsets = [8, 0], sizes = [8, 256], strides = [1, 1]} : vector<16x256xf32> to vector<8x256xf32>
    %c0_9 = arith.constant 0 : index
    %c0_10 = arith.constant 0 : index
    %c0_11 = arith.constant 0 : index
    %12 = vector.load %arg6[%c0_9, %c0_10, %c0_11] : memref<1x8x256xf32, #tpu.memory_space<vmem>>, vector<1x8x256xf32>
    %13 = vector.shape_cast %12 : vector<1x8x256xf32> to vector<8x256xf32>
    %14 = vector.shape_cast %11 : vector<8x256xf32> to vector<1x8x256xf32>
    tpu.vector_store %arg6[%c0_9, %c0_10, %c0_11], %14 {strides = array<i32>} : memref<1x8x256xf32, #tpu.memory_space<vmem>>, vector<1x8x256xf32>,
    return
  }
  func.func @transform_0(%arg0: i32, %arg1: i32) -> (i32, i32, i32) {
    %c0_i32 = arith.constant 0 : i32
    %c0_i32_0 = arith.constant 0 : i32
    return %arg0, %c0_i32, %arg1 : i32, i32, i32
  }
  func.func @transform_1(%arg0: i32, %arg1: i32) -> (i32, i32) {
    %c0_i32 = arith.constant 0 : i32
    %c0_i32_0 = arith.constant 0 : i32
    %c0_i32_1 = arith.constant 0 : i32
    return %c0_i32, %c0_i32_0 : i32, i32
  }
  func.func @transform_2(%arg0: i32, %arg1: i32) -> (i32, i32) {
    %c0_i32 = arith.constant 0 : i32
    %c0_i32_0 = arith.constant 0 : i32
    %c0_i32_1 = arith.constant 0 : i32
    return %c0_i32, %c0_i32_0 : i32, i32
  }
  func.func @transform_3(%arg0: i32, %arg1: i32) -> (i32, i32, i32) {
    %c0_i32 = arith.constant 0 : i32
    %c0_i32_0 = arith.constant 0 : i32
    return %arg0, %c0_i32, %arg1 : i32, i32, i32
  }
  func.func @transform_4(%arg0: i32, %arg1: i32) -> (i32, i32, i32) {
    %c0_i32 = arith.constant 0 : i32
    %c0_i32_0 = arith.constant 0 : i32
    return %arg0, %c0_i32, %arg1 : i32, i32, i32
  }
}

</mosaic_0001>

<llo_original>
// kernel: tpu_custom_call.1
$region0: #{tpu_custom_call.1}
  #allocation0 [shape = 'u32[]', space=smem, size = 0x4, offset = 0x4, fixed_abs, tag = 'smem constant byte address 0x4 - core index']
  #allocation1 [shape = 'u32[144,128]{1,0:T(1,128)}', space=vmem, size = 0x12000, scoped, tag = 'internal scratch']
  %s0 = inlined_call_operand.hbm [shape: f32[2,32,256], index: 0, kind: input, shape index: {}]
  %s1 = inlined_call_operand.vmem [shape: f32[16,32], index: 1, kind: input, shape index: {}]
  %s2 = inlined_call_operand.vmem [shape: f32[16,1], index: 2, kind: input, shape index: {}]
  %s3 = inlined_call_operand.hbm [shape: f32[2,8,256], index: 3, kind: output, shape index: {0}]
  %s4 = inlined_call_operand.hbm [shape: f32[2,8,256], index: 4, kind: output, shape index: {1}]
  %5 = xla_tuple %s3, %s4
  %s6 = sld [smem:[#allocation0]]
  $region57: #{tpu_custom_call.1} parent=0
    _
  %s8 = ssub.s32 1, %s6
  %s9 = scalar_select 0, %s8, %s6
  $region1: #{tpu_custom_call.1} parent=0
    #allocation2 [shape = 'u8[65536]{0}', space=vmem, size = 0x10000, scoped, tag = 'input window, operand 0']
    #allocation3 [shape = 's32[2]{0}', space=sflag, size = 0x8, scoped, tag = 'scoped memory for tpu_custom_call.1']
    #allocation4 [shape = 's32[2]{0}', space=sflag, size = 0x8, scoped, tag = 'scoped memory for tpu_custom_call.1']
    #allocation5 [shape = 'u8[16384]{0}', space=vmem, size = 0x4000, scoped, tag = 'output window, operand 0']
    #allocation6 [shape = 'u8[16384]{0}', space=vmem, size = 0x4000, scoped, tag = 'output window, operand 1']
    #allocation7 [shape = 's32[2]{0}', space=sflag, size = 0x8, scoped, tag = 'scoped memory for tpu_custom_call.1']
    %10 = vsyncpa [#allocation3], 0
    %s11 = scalar_lea.sflag [#allocation3], 1
    %12 = vsyncpa %s11, 0
    %13 = vsyncpa [#allocation4], 0
    %s14 = scalar_lea.sflag [#allocation4], 1
    %15 = vsyncpa %s14, 0
    %16 = vsyncpa [#allocation7], 0
    %s17 = scalar_lea.sflag [#allocation7], 1
    %18 = vsyncpa %s17, 0
    loop: start=0, step=1, limit=4
    $region2: #{tpu_custom_call.1} parent=1 // loop_pre_header
      _
    $region3: #{tpu_custom_call.1} parent=1 // loop_header
      %s20 = sphi 0, %s24
      %p21 = scmp.ge.s32.totalorder %s20, 4
      %s27 = sphi 0, %s39
      %s28 = sphi 0, %s35
      %s29 = sphi 0, %s27
      %s30 = sphi 0, %s28
      %s31 = sphi 0, %s29
      %s32 = sphi 0, %s30
      %s44 = sphi 0, %s46
      %s47 = sphi 0, %s44
      %s48 = sphi 0, %s47
      %s64 = sphi 0, %s48
      %s68 = sphi 0, %s68
      %s70 = sphi 0, %s68
      %s71 = sphi 0, %s70
      %s85 = sphi 0, %s71
      %s89 = sphi 0, %s89
      %s91 = sphi 0, %s89
      %s92 = sphi 0, %s91
      %s106 = sphi 0, %s92
      %s114 = sphi 0, %s116
      %s117 = sphi 0, %s114
      %s118 = sphi 0, %s117
      %s134 = sphi 0, %s118
      %s142 = sphi 0, %s144
      %s145 = sphi 0, %s142
      %s146 = sphi 0, %s145
      %s162 = sphi 0, %s146
    $region4: #{tpu_custom_call.1} parent=1 // loop_header_branch
      %23 = sbr.rel (%p21) target = $region8
    $region5: #{tpu_custom_call.1} parent=1 // loop_body
      %s25 = ssub.s32 %s20, 1
      %s26 = ssub.s32 %s20, 2
      %s33 = sadd.s32 1, %s28
      %p34 = scmp.ge.s32.totalorder %s33, 1
      %s35 = scalar_select %p34, 0, %s33
      %s36 = sadd.s32 1, %s27
      %s37 = scalar_select %p34, %s36, %s27
      %p38 = scmp.ge.s32.totalorder %s37, 2
      %s39 = scalar_select %p38, 0, %s37
      %s40 = ssub.s32 %s27, %s39
      %s41 = ssub.s32 %s28, %s35
      %s42 = sor.u32 %s40, %s41
      %p43 = scmp.eq.s32.totalorder %s42, 0
      %s45 = sadd.s32 %s44, 1
      %s46 = scalar_select %p43, %s44, %s45
      %p49 = pneg %p43
      %p50 = scmp.eq.s32.totalorder %s20, 1
      %p51 = por %p49, %p50
      %p52 = scmp.ne.s32.totalorder %s44, %s47
      %p53 = scmp.eq.s32.totalorder %s20, 0
      %p54 = por %p52, %p53
      %p55 = scmp.ne.s32.totalorder %s44, %s47
      %p56 = scmp.eq.s32.totalorder %s25, 1
      %p57 = por %p55, %p56
      %p58 = scmp.ne.s32.totalorder %s47, %s48
      %p59 = scmp.eq.s32.totalorder %s25, 0
      %p60 = por %p58, %p59
      %p61 = scmp.ne.s32.totalorder %s47, %s48
      %p62 = scmp.eq.s32.totalorder %s26, 1
      %p63 = por %p61, %p62
      %p65 = scmp.ne.s32.totalorder %s48, %s64
      %p66 = scmp.eq.s32.totalorder %s26, 0
      %p67 = por %p65, %p66
      %s69 = sadd.s32 %s68, 1
      %p72 = scmp.eq.s32.totalorder %s20, 1
      %p73 = scmp.ne.s32.totalorder %s68, %s70
      %p74 = scmp.eq.s32.totalorder %s20, 0
      %p75 = por %p73, %p74
      %p76 = scmp.ne.s32.totalorder %s68, %s70
      %p77 = scmp.eq.s32.totalorder %s25, 1
      %p78 = por %p76, %p77
      %p79 = scmp.ne.s32.totalorder %s70, %s71
      %p80 = scmp.eq.s32.totalorder %s25, 0
      %p81 = por %p79, %p80
      %p82 = scmp.ne.s32.totalorder %s70, %s71
      %p83 = scmp.eq.s32.totalorder %s26, 1
      %p84 = por %p82, %p83
      %p86 = scmp.ne.s32.totalorder %s71, %s85
      %p87 = scmp.eq.s32.totalorder %s26, 0
      %p88 = por %p86, %p87
      %s90 = sadd.s32 %s89, 1
      %p93 = scmp.eq.s32.totalorder %s20, 1
      %p94 = scmp.ne.s32.totalorder %s89, %s91
      %p95 = scmp.eq.s32.totalorder %s20, 0
      %p96 = por %p94, %p95
      %p97 = scmp.ne.s32.totalorder %s89, %s91
      %p98 = scmp.eq.s32.totalorder %s25, 1
      %p99 = por %p97, %p98
      %p100 = scmp.ne.s32.totalorder %s91, %s92
      %p101 = scmp.eq.s32.totalorder %s25, 0
      %p102 = por %p100, %p101
      %p103 = scmp.ne.s32.totalorder %s91, %s92
      %p104 = scmp.eq.s32.totalorder %s26, 1
      %p105 = por %p103, %p104
      %p107 = scmp.ne.s32.totalorder %s92, %s106
      %p108 = scmp.eq.s32.totalorder %s26, 0
      %p109 = por %p107, %p108
      %s110 = ssub.s32 %s27, %s39
      %s111 = ssub.s32 %s28, %s35
      %s112 = sor.u32 %s110, %s111
      %p113 = scmp.eq.s32.totalorder %s112, 0
      %s115 = sadd.s32 %s114, 1
      %s116 = scalar_select %p113, %s114, %s115
      %p119 = pneg %p113
      %p120 = scmp.eq.s32.totalorder %s20, 1
      %p121 = por %p119, %p120
      %p122 = scmp.ne.s32.totalorder %s114, %s117
      %p123 = scmp.eq.s32.totalorder %s20, 0
      %p124 = por %p122, %p123
      %p125 = scmp.ne.s32.totalorder %s114, %s117
      %p126 = scmp.eq.s32.totalorder %s25, 1
      %p127 = por %p125, %p126
      %p128 = scmp.ne.s32.totalorder %s117, %s118
      %p129 = scmp.eq.s32.totalorder %s25, 0
      %p130 = por %p128, %p129
      %p131 = scmp.ne.s32.totalorder %s117, %s118
      %p132 = scmp.eq.s32.totalorder %s26, 1
      %p133 = por %p131, %p132
      %p135 = scmp.ne.s32.totalorder %s118, %s134
      %p136 = scmp.eq.s32.totalorder %s26, 0
      %p137 = por %p135, %p136
      %s138 = ssub.s32 %s27, %s39
      %s139 = ssub.s32 %s28, %s35
      %s140 = sor.u32 %s138, %s139
      %p141 = scmp.eq.s32.totalorder %s140, 0
      %s143 = sadd.s32 %s142, 1
      %s144 = scalar_select %p141, %s142, %s143
      %p147 = pneg %p141
      %p148 = scmp.eq.s32.totalorder %s20, 1
      %p149 = por %p147, %p148
      %p150 = scmp.ne.s32.totalorder %s142, %s145
      %p151 = scmp.eq.s32.totalorder %s20, 0
      %p152 = por %p150, %p151
      %p153 = scmp.ne.s32.totalorder %s142, %s145
      %p154 = scmp.eq.s32.totalorder %s25, 1
      %p155 = por %p153, %p154
      %p156 = scmp.ne.s32.totalorder %s145, %s146
      %p157 = scmp.eq.s32.totalorder %s25, 0
      %p158 = por %p156, %p157
      %p159 = scmp.ne.s32.totalorder %s145, %s146
      %p160 = scmp.eq.s32.totalorder %s26, 1
      %p161 = por %p159, %p160
      %p163 = scmp.ne.s32.totalorder %s146, %s162
      %p164 = scmp.eq.s32.totalorder %s26, 0
      %p165 = por %p163, %p164
      %p166 = scmp.le.s32.totalorder 1, %s20
      %p167 = scmp.lt.s32.totalorder %s20, 3
      %p168 = pnand %p166, %p167
      %p169 = pneg %p168
      // Predicated region
      $region9: #{tpu_custom_call.1} parent=5 // pred_check
        _
      $region10: #{tpu_custom_call.1} parent=5 // pred_check_branch
        %171 = sbr.rel (%p168) target = $region12
      $region11: #{tpu_custom_call.1} parent=5 // pred_region
        %s172 = ssub.s32 %s20, 1
        // Predicated region
        $region13: #{tpu_custom_call.1} parent=11 // pred_check
          %p173 = pneg %p81
        $region14: #{tpu_custom_call.1} parent=11 // pred_check_branch
          %175 = sbr.rel (%p173) target = $region16
        $region15: #{tpu_custom_call.1} parent=11 // pred_region
          _
        $region16: #{tpu_custom_call.1} parent=11 // pred_fallthru
          _
        // Predicated region
        $region17: #{tpu_custom_call.1} parent=11 // pred_check
          %p176 = pneg %p102
        $region18: #{tpu_custom_call.1} parent=11 // pred_check_branch
          %178 = sbr.rel (%p176) target = $region20
        $region19: #{tpu_custom_call.1} parent=11 // pred_region
          _
        $region20: #{tpu_custom_call.1} parent=11 // pred_fallthru
          _
      $region12: #{tpu_custom_call.1} parent=5 // pred_fallthru
        _
      %p179 = scmp.lt.s32.totalorder %s20, 2
      // Predicated region
      $region21: #{tpu_custom_call.1} parent=5 // pred_check
        %p180 = pneg %p179
      $region22: #{tpu_custom_call.1} parent=5 // pred_check_branch
        %182 = sbr.rel (%p180) target = $region24
      $region23: #{tpu_custom_call.1} parent=5 // pred_region
        // Predicated region
        $region25: #{tpu_custom_call.1} parent=23 // pred_check
          %p183 = pneg %p54
        $region26: #{tpu_custom_call.1} parent=23 // pred_check_branch
          %185 = sbr.rel (%p183) target = $region28
        $region27: #{tpu_custom_call.1} parent=23 // pred_region
          %s186 = sand.u32 %s44, 1
          %s187 = scalar_lea.sflag [#allocation3], %s186
          %s188 = sand.u32 %s44, 1
          %s189 = smul.addr %s188, 64
          %s190 = scalar_lea.vmem [#allocation2], %s189
          %s191 = smul.u32 2, %s28
          %s193 = ssub.s32 1024, 1024
          %194 = vsyncadd %s187, %s193
          %s195 = smul.addr %s27, 8
          %s196 = sadd.s32 %s191, %s195
          %s197 = smul.addr %s196, 128
          %s198 = scalar_lea.hbm %s0, %s197
          %s199 = sshll.u32 %s190, 4
          %s200 = int_to_ptr.vmem [resolvable:$true] %s199
          %205 = dma.hbm_to_vmem [thread:$0]  %s198, 1024, %s200, %s187, 256, 256, 16
        $region28: #{tpu_custom_call.1} parent=23 // pred_fallthru
          _
      $region24: #{tpu_custom_call.1} parent=5 // pred_fallthru
        _
      %p206 = scmp.le.s32.totalorder 1, %s20
      %p207 = scmp.lt.s32.totalorder %s20, 3
      %p208 = pnand %p206, %p207
      %p209 = pneg %p208
      // Predicated region
      $region29: #{tpu_custom_call.1} parent=5 // pred_check
        _
      $region30: #{tpu_custom_call.1} parent=5 // pred_check_branch
        %211 = sbr.rel (%p208) target = $region32
      $region31: #{tpu_custom_call.1} parent=5 // pred_region
        %s212 = ssub.s32 %s20, 1
        %s213 = sand.u32 %s47, 1
        %s214 = scalar_lea.sflag [#allocation3], %s213
        %s215 = sand.u32 %s47, 1
        %s216 = smul.addr %s215, 64
        %s217 = scalar_lea.vmem [#allocation2], %s216
        // Predicated region
        $region33: #{tpu_custom_call.1} parent=31 // pred_check
          %p218 = pneg %p60
        $region34: #{tpu_custom_call.1} parent=31 // pred_check_branch
          %220 = sbr.rel (%p218) target = $region36
        $region35: #{tpu_custom_call.1} parent=31 // pred_region
          %221 = dma.done %s214, 1024
        $region36: #{tpu_custom_call.1} parent=31 // pred_fallthru
          _
        %s222 = sand.u32 %s47, 1
        %s223 = scalar_lea.sflag [#allocation3], %s222
        %s224 = sand.u32 %s47, 1
        %s225 = smul.addr %s224, 64
        %s226 = scalar_lea.vmem [#allocation2], %s225
        %p227 = pneg %p60
        %p228 = pneg %p57
        %p229 = pneg %p81
        %p230 = pneg %p78
        %p231 = pneg %p102
        %p232 = pneg %p99
        %p233 = pneg %p130
        %p234 = pneg %p127
        %s235 = sand.u32 %s117, 1
        %s236 = scalar_lea.sflag [#allocation4], %s235
        %s237 = sand.u32 %s117, 1
        %s238 = smul.addr %s237, 16
        %s239 = scalar_lea.vmem [#allocation5], %s238
        %p240 = pneg %p158
        %p241 = pneg %p155
        %s242 = sand.u32 %s145, 1
        %s243 = scalar_lea.sflag [#allocation7], %s242
        %s244 = sand.u32 %s145, 1
        %s245 = smul.addr %s244, 16
        %s246 = scalar_lea.vmem [#allocation6], %s245
        %s247 = smul.u32 2, %s30
        %s248 = smul.u32 2, %s30
        %s249 = smul.u32 2, %s30
        %v250 = vld [vmem:[%s217] sm:$0xff]
        %v251 = vld [vmem:[%s217 + $0x8] sm:$0xff]
        %v252 = vld [vmem:[%s217 + $0x10] sm:$0xff]
        %v253 = vld [vmem:[%s217 + $0x18] sm:$0xff]
        %v254 = vld [vmem:[%s217 + $0x20] sm:$0xff]
        %v255 = vld [vmem:[%s217 + $0x28] sm:$0xff]
        %v256 = vld [vmem:[%s217 + $0x30] sm:$0xff]
        %v257 = vld [vmem:[%s217 + $0x38] sm:$0xff]
        %v258 = vld [vmem:[%s1] sm:$0xff]
        %v259 = vld [vmem:[%s1 + $0x8] sm:$0xff]
        %v260 = vld [vmem:[%s2] sm:$0xff]
        %v261 = vld [vmem:[%s2 + $0x8] sm:$0xff]
        %263 = vset.pattern.permute.xlu0 0
        %264 = vperm.xlu0 %263, %v260
        %v265 = vpop.permute.xlu0 %264
        %268 = vset.pattern.permute.xlu0 0
        %269 = vperm.xlu0 %268, %v261
        %v270 = vpop.permute.xlu0 %269
        %vm272 = vcmask 261120
        %v274 = vsel %vm272, %v258, 0
        %v277 = vsel %vm272, %v259, 0
        %279 = vmatprep.subr.mxu0 %v251
        %280 = vmatpush1.msra.mxu0 %v250
        %281 = vmatprep.subr.mxu0 %v253
        %282 = vmatpush1.msra.mxu0 %v252
        %283 = vmatprep.subr.mxu0 %v255
        %284 = vmatpush1.msra.mxu0 %v254
        %285 = vmatprep.subr.mxu0 %v257
        %286 = vmatpush1.msra.mxu0 %v256
        %287 = vmatprep.subr.mxu0 0.0
        %288 = vmatpush1.msra.mxu0 0.0
        %289 = vmatprep.subr.mxu0 0.0
        %290 = vmatpush1.msra.mxu0 0.0
        %291 = vmatprep.subr.mxu0 0.0
        %292 = vmatpush1.msra.mxu0 0.0
        %293 = vmatprep.subr.mxu0 0.0
        %294 = vmatpush1.msra.mxu0 0.0
        %295 = vmatprep.subr.mxu0 0.0
        %296 = vmatpush1.msra.mxu0 0.0
        %297 = vmatprep.subr.mxu0 0.0
        %298 = vmatpush1.msra.mxu0 0.0
        %299 = vmatprep.subr.mxu0 0.0
        %300 = vmatpush1.msra.mxu0 0.0
        %301 = vmatprep.subr.mxu0 0.0
        %302 = vmatpush1.msra.mxu0 0.0
        %303 = vmatprep.subr.mxu0 0.0
        %304 = vmatpush1.msra.mxu0 0.0
        %305 = vmatprep.subr.mxu0 0.0
        %306 = vmatpush1.msra.mxu0 0.0
        %307 = vmatprep.subr.mxu0 0.0
        %308 = vmatpush1.msra.mxu0 0.0
        %309 = vmatprep.subr.mxu0 0.0
        %310 = vmatpush1.msra.mxu0 0.0
        %311 = vmatprep.subr.mxu0 0.0
        %312 = vmatpush1.msra.mxu0 0.0
        %313 = vmatprep.subr.mxu0 0.0
        %314 = vmatpush1.msra.mxu0 0.0
        %315 = vmatprep.subr.mxu0 0.0
        %316 = vmatpush1.msra.mxu0 0.0
        %317 = vmatprep.subr.mxu0 0.0
        %318 = vmatpush1.msra.mxu0 0.0
        %319 = vmatprep.subr.mxu0 0.0
        %320 = vmatpush1.msra.mxu0 0.0
        %321 = vmatprep.subr.mxu0 0.0
        %322 = vmatpush1.msra.mxu0 0.0
        %323 = vmatprep.subr.mxu0 0.0
        %324 = vmatpush1.msra.mxu0 0.0
        %325 = vmatprep.subr.mxu0 0.0
        %326 = vmatpush1.msra.mxu0 0.0
        %327 = vmatprep.subr.mxu0 0.0
        %328 = vmatpush1.msra.mxu0 0.0
        %329 = vmatprep.subr.mxu0 0.0
        %330 = vmatpush1.msra.mxu0 0.0
        %331 = vmatprep.subr.mxu0 0.0
        %332 = vmatpush1.msra.mxu0 0.0
        %333 = vmatprep.subr.mxu0 0.0
        %334 = vmatpush1.msra.mxu0 0.0
        %335 = vmatprep.subr.mxu0 0.0
        %336 = vmatpush1.msra.mxu0 0.0
        %337 = vmatprep.subr.mxu0 0.0
        %338 = vmatpush1.msra.mxu0 0.0
        %339 = vmatprep.subr.mxu0 0.0
        %340 = vmatpush1.msra.mxu0 0.0
        %341 = vmatprep.subr.mxu0 0.0
        %342 = vmatpush1.msra.mxu0 0.0
        %343 = vmatprep.mubr.f32.mxu0 0.0
        %344 = vmatmul.mubr.f32.gmra.mrb[0].mxu0 %v274
        %v345 = vpop.f32.mrb[0].mxu0
        %v346 = vadd.f32 %v265, %v345
        %v347 = vpop.f32.mrb[0].mxu0
        %v348 = vadd.f32 %v265, %v347
        %349 = vmatprep.mubr.f32.mxu0 0.0
        %350 = vmatmul.mubr.f32.gmra.mrb[0].mxu0 %v277
        %v351 = vpop.f32.mrb[0].mxu0
        %v352 = vadd.f32 %v270, %v351
        %v353 = vpop.f32.mrb[0].mxu0
        %v354 = vadd.f32 %v270, %v353
        %355 = vdwg.mxu0
        %356 = vst [vmem:[%s239] sm:$0xff] %v346
        %357 = vst [vmem:[%s239 + $0x8] sm:$0xff] %v348
        %358 = vst [vmem:[%s246] sm:$0xff] %v352
        %359 = vst [vmem:[%s246 + $0x8] sm:$0xff] %v354
        %s360 = sand.u32 %s117, 1
        %s361 = scalar_lea.sflag [#allocation4], %s360
        %s362 = sand.u32 %s117, 1
        %s363 = smul.addr %s362, 16
        %s364 = scalar_lea.vmem [#allocation5], %s363
        %s365 = sand.u32 %s145, 1
        %s366 = scalar_lea.sflag [#allocation7], %s365
        %s367 = sand.u32 %s145, 1
        %s368 = smul.addr %s367, 16
        %s369 = scalar_lea.vmem [#allocation6], %s368
        // Predicated region
        $region37: #{tpu_custom_call.1} parent=31 // pred_check
          %p370 = pneg %p127
        $region38: #{tpu_custom_call.1} parent=31 // pred_check_branch
          %372 = sbr.rel (%p370) target = $region40
        $region39: #{tpu_custom_call.1} parent=31 // pred_region
          %s373 = smul.u32 2, %s30
          %s375 = ssub.s32 256, 256
          %376 = vsyncadd %s361, %s375
          %s377 = smul.addr %s29, 2
          %s378 = sadd.s32 %s373, %s377
          %s379 = smul.addr %s378, 128
          %s380 = scalar_lea.hbm %s3, %s379
          %s382 = sshll.u32 %s364, 4
          %s383 = int_to_ptr.vmem [resolvable:$true] %s382
          %385 = dma.vmem_to_hbm [thread:$0]  %s383, 256, %s380, %s361
        $region40: #{tpu_custom_call.1} parent=31 // pred_fallthru
          _
        // Predicated region
        $region41: #{tpu_custom_call.1} parent=31 // pred_check
          %p386 = pneg %p155
        $region42: #{tpu_custom_call.1} parent=31 // pred_check_branch
          %388 = sbr.rel (%p386) target = $region44
        $region43: #{tpu_custom_call.1} parent=31 // pred_region
          %s389 = smul.u32 2, %s30
          %s391 = ssub.s32 256, 256
          %392 = vsyncadd %s366, %s391
          %s393 = smul.addr %s29, 2
          %s394 = sadd.s32 %s389, %s393
          %s395 = smul.addr %s394, 128
          %s396 = scalar_lea.hbm %s4, %s395
          %s398 = sshll.u32 %s369, 4
          %s399 = int_to_ptr.vmem [resolvable:$true] %s398
          %401 = dma.vmem_to_hbm [thread:$0]  %s399, 256, %s396, %s366
        $region44: #{tpu_custom_call.1} parent=31 // pred_fallthru
          _
      $region32: #{tpu_custom_call.1} parent=5 // pred_fallthru
        _
      %p402 = scmp.le.s32.totalorder 2, %s20
      // Predicated region
      $region45: #{tpu_custom_call.1} parent=5 // pred_check
        %p403 = pneg %p402
      $region46: #{tpu_custom_call.1} parent=5 // pred_check_branch
        %405 = sbr.rel (%p403) target = $region48
      $region47: #{tpu_custom_call.1} parent=5 // pred_region
        %s406 = ssub.s32 %s20, 2
        // Predicated region
        $region49: #{tpu_custom_call.1} parent=47 // pred_check
          %p407 = pneg %p133
        $region50: #{tpu_custom_call.1} parent=47 // pred_check_branch
          %409 = sbr.rel (%p407) target = $region52
        $region51: #{tpu_custom_call.1} parent=47 // pred_region
          %s410 = sand.u32 %s118, 1
          %s411 = scalar_lea.sflag [#allocation4], %s410
          %s412 = sand.u32 %s118, 1
          %s413 = smul.addr %s412, 16
          %s414 = scalar_lea.vmem [#allocation5], %s413
          %415 = dma.done %s411, 256
        $region52: #{tpu_custom_call.1} parent=47 // pred_fallthru
          _
        // Predicated region
        $region53: #{tpu_custom_call.1} parent=47 // pred_check
          %p416 = pneg %p161
        $region54: #{tpu_custom_call.1} parent=47 // pred_check_branch
          %418 = sbr.rel (%p416) target = $region56
        $region55: #{tpu_custom_call.1} parent=47 // pred_region
          %s419 = sand.u32 %s146, 1
          %s420 = scalar_lea.sflag [#allocation7], %s419
          %s421 = sand.u32 %s146, 1
          %s422 = smul.addr %s421, 16
          %s423 = scalar_lea.vmem [#allocation6], %s422
          %424 = dma.done %s420, 256
        $region56: #{tpu_custom_call.1} parent=47 // pred_fallthru
          _
      $region48: #{tpu_custom_call.1} parent=5 // pred_fallthru
        _
    $region6: #{tpu_custom_call.1} parent=1 // loop_footer
      %s24 = sadd.s32 1, %s20
    $region7: #{tpu_custom_call.1} parent=1 // loop_footer_branch
      %19 = sbr.rel target = $region3
    $region8: #{tpu_custom_call.1} parent=1 // loop_exit
      _
    %425 = vsyncpa [#allocation3], 1
    %s426 = scalar_lea.sflag [#allocation3], 1
    %427 = vsyncpa %s426, 1
    %428 = vsyncpa [#allocation4], 1
    %s429 = scalar_lea.sflag [#allocation4], 1
    %430 = vsyncpa %s429, 1
    %431 = vsyncpa [#allocation7], 1
    %s432 = scalar_lea.sflag [#allocation7], 1
    %433 = vsyncpa %s432, 1

</llo_original>
